<compile_context>
chip_gen: v7x
topology: tpu7x:2x2x1
jax: 0.10.0
libtpu: 0.0.40
codegen_flags: <defaults>
</compile_context>

<pallas_src>
import math

import numpy as np
import jax
import jax.numpy as jnp
from jax.experimental import pallas as pl
from jax.experimental.pallas import tpu as pltpu


_BINOMIAL_ROWS = {
    1: [1.0],
    2: [1.0, 1.0],
    3: [1.0, 2.0, 1.0],
    4: [1.0, 3.0, 3.0, 1.0],
    5: [1.0, 4.0, 6.0, 4.0, 1.0],
    6: [1.0, 5.0, 10.0, 10.0, 5.0, 1.0],
    7: [1.0, 6.0, 15.0, 20.0, 15.0, 6.0, 1.0],
}

_MODE_CANON = {
    "constant": "constant",
    "zeros": "constant",
    "reflect": "reflect",
    "replicate": "replicate",
    "circular": "circular",
}

_MODE_TO_JNP = {
    "constant": "constant",
    "reflect": "reflect",
    "replicate": "edge",
    "circular": "wrap",
}


def _separable_taps(filter_size: int, filter_scale: float):
    """1-D taps a such that outer(a, a) == normalized binomial kxk * scale^2."""
    row = np.array(_BINOMIAL_ROWS[filter_size], dtype=np.float64)
    taps = (row / row.sum()) * float(filter_scale)
    return [float(t) for t in taps]


def _pad_lr(filter_size: int):
    _pad = (filter_size - 1) / 2
    return int(math.floor(_pad)), int(math.ceil(_pad))


def _map_index(c: int, n: int, mode: str):
    """Map a (static) out-of-range coordinate through the padding mode.
    Returns an int in [0, n) or None for constant (zero) padding."""
    if 0 <= c < n:
        return c
    if mode == "constant":
        return None
    if mode == "reflect":
        return -c if c < 0 else 2 * n - 2 - c
    if mode == "replicate":
        return 0 if c < 0 else n - 1
    if mode == "circular":
        return c % n
    raise ValueError("unsupported padding_mode", mode)


def _vmem_params(budget_override=None):
    """Generation-aware VMEM sizing: per-step working-set budget + compiler limit."""
    cap = 64 * 1024 * 1024  # conservative default (v7x per-TC VMEM)
    try:
        info = pltpu.get_tpu_info()
        cap = int(getattr(info, "vmem_capacity_bytes", cap) or cap)
    except Exception:
        pass
    # ~40% of physical VMEM for the (double-buffered) working set, ~75% as the
    # compiler's scoped limit: 51 MiB / 96 MiB on v5e/v6e, 25 MiB / 48 MiB on v7x.
    budget = (cap * 2) // 5 if budget_override is None else int(budget_override)
    limit = (cap * 3) // 4
    return budget, limit


def _run_planes(x3, *, k, taps, pad_t, pad_b, pad_l, pad_r, mode, budget, vmem_limit):
    """Separable binomial blur over (NC, Hin, W) planes with in-kernel padding.

    Returns (NC, Ho, Wo) with Ho = Hin + pad_t + pad_b - k + 1 and
    Wo = W + pad_l + pad_r - k + 1.  All pads / mode / taps are static.
    """
    NC, Hin, W = x3.shape
    Hp = Hin + pad_t + pad_b
    Wp = W + pad_l + pad_r
    Ho = Hp - k + 1
    Wo = Wp - k + 1
    out_dtype = x3.dtype
    itemsize = jnp.dtype(out_dtype).itemsize

    # Per-plane working set: double-buffered input/output blocks plus the
    # single-buffered f32 separable intermediate (accumulators live in vregs,
    # not VMEM, so they are not counted).
    per_plane = 2 * Hin * W * itemsize + 2 * Ho * Wo * itemsize + Hp * Wo * 4
    P = max(1, min(NC, budget // max(per_plane, 1)))
    if NC > 1 and P >= NC:
        # Keep >= 2 grid steps so the DMA/compute pipeline (and both v7x
        # TensorCores under dimension_semantics=('parallel',)) have work.
        P = (NC + 1) // 2
    grid = (pl.cdiv(NC, P),)  # ragged last block: OOB planes are masked on write

    Wi = W - k + 1                                  # interior output columns
    interior = range(pad_l, pad_l + max(Wi, 0))
    border_cols = [w for w in range(Wo) if w not in interior]
    half, odd = k // 2, k % 2

    def kernel(x_ref, o_ref, tmp_ref):
        f32 = jnp.float32

        # --- horizontal (lane-axis) pass: interior via full-width slices,
        #     symmetric taps paired (add first, one multiply per pair) ---
        if Wi > 0:
            acc = None
            for j in range(half):
                s = (x_ref[:, :, j:j + Wi].astype(f32)
                     + x_ref[:, :, k - 1 - j:k - 1 - j + Wi].astype(f32)) * taps[j]
                acc = s if acc is None else acc + s
            if odd:
                s = x_ref[:, :, half:half + Wi].astype(f32) * taps[half]
                acc = s if acc is None else acc + s
            tmp_ref[:, pad_t:pad_t + Hin, pad_l:pad_l + Wi] = acc

        # --- horizontal border columns: padding built from the resident tile ---
        for w in border_cols:
            col = None
            for j in range(k):
                c = _map_index(w - pad_l + j, W, mode)
                if c is None:          # zero padding -> term vanishes
                    continue
                term = x_ref[:, :, c:c + 1].astype(f32) * taps[j]
                col = term if col is None else col + term
            if col is None:
                col = jnp.zeros((P, Hin, 1), f32)
            tmp_ref[:, pad_t:pad_t + Hin, w:w + 1] = col

        # --- vertical padding rows of the intermediate (row copies / zeros) ---
        for q in range(pad_t):
            r = _map_index(q - pad_t, Hin, mode)
            if r is None:
                tmp_ref[:, q:q + 1, :] = jnp.zeros((P, 1, Wo), f32)
            else:
                tmp_ref[:, q:q + 1, :] = tmp_ref[:, pad_t + r:pad_t + r + 1, :]
        for q in range(pad_b):
            row = pad_t + Hin + q
            r = _map_index(Hin + q, Hin, mode)
            if r is None:
                tmp_ref[:, row:row + 1, :] = jnp.zeros((P, 1, Wo), f32)
            else:
                tmp_ref[:, row:row + 1, :] = tmp_ref[:, pad_t + r:pad_t + r + 1, :]

        # --- vertical (sublane-axis) pass, symmetric taps paired ---
        out = None
        for i in range(half):
            s = (tmp_ref[:, i:i + Ho, :] + tmp_ref[:, k - 1 - i:k - 1 - i + Ho, :]) * taps[i]
            out = s if out is None else out + s
        if odd:
            s = tmp_ref[:, half:half + Ho, :] * taps[half]
            out = s if out is None else out + s
        o_ref[...] = out.astype(o_ref.dtype)

    return pl.pallas_call(
        kernel,
        out_shape=jax.ShapeDtypeStruct((NC, Ho, Wo), out_dtype),
        grid_spec=pltpu.PrefetchScalarGridSpec(
            num_scalar_prefetch=0,
            grid=grid,
            in_specs=[pl.BlockSpec((P, Hin, W), lambda p: (p, 0, 0))],
            out_specs=pl.BlockSpec((P, Ho, Wo), lambda p: (p, 0, 0)),
            scratch_shapes=[pltpu.VMEM((P, Hp, Wo), jnp.float32)],
        ),
        compiler_params=pltpu.CompilerParams(
            dimension_semantics=("parallel",),
            vmem_limit_bytes=int(vmem_limit),
        ),
        cost_estimate=pl.CostEstimate(
            flops=int(4 * k * NC * Ho * Wo),
            transcendentals=0,
            bytes_accessed=int(NC * (Hin * W + Ho * Wo) * itemsize),
        ),
    )(x3)


def _halo_rows(x3, coords, mode):
    """Materialize out-of-range rows (static coords) per the padding mode."""
    NC, H, W = x3.shape
    if mode == "constant":
        return jnp.zeros((NC, len(coords), W), x3.dtype)
    rows = []
    for c in coords:
        m = _map_index(c, H, mode)
        rows.append(x3[:, m:m + 1, :])
    return rows[0] if len(rows) == 1 else jnp.concatenate(rows, axis=1)


def low_pass_filter(
    x: jax.Array,
    *,
    filter_size: int,
    padding: str = "same",
    padding_mode: str = "reflect",
    filter_scale: float = 1.0,
    _vmem_budget_bytes=None,   # test hook: override the VMEM working-set budget
) -> jax.Array:
    """Depthwise binomial low-pass filter, NCHW in / NCHW out (== module forward)."""
    if padding not in ("valid", "same"):
        raise ValueError("padding must be one of ('valid', 'same')", padding)
    if filter_size not in _BINOMIAL_ROWS:
        raise ValueError("Filter size must be 1-7", filter_size)
    mode = _MODE_CANON.get(padding_mode)
    if mode is None:
        raise ValueError("unsupported padding_mode", padding_mode)

    N, C, H, W = x.shape
    k = filter_size
    taps = _separable_taps(k, filter_scale)          # static python floats

    if padding == "same":
        pad_l, pad_r = _pad_lr(k)
        pad_t, pad_b = pad_l, pad_r                  # module pads H and W identically
    else:
        pad_l = pad_r = pad_t = pad_b = 0

    Ho = H + pad_t + pad_b - k + 1
    Wo = W + pad_l + pad_r - k + 1
    if Ho <= 0 or Wo <= 0:
        raise ValueError("filter larger than (padded) input")
    if mode == "reflect" and (max(pad_l, pad_r) >= W or max(pad_t, pad_b) >= H):
        raise ValueError("reflect padding requires pad < spatial dim")
    if mode == "circular" and (max(pad_l, pad_r) > W or max(pad_t, pad_b) > H):
        raise ValueError("circular padding requires pad <= spatial dim")

    budget, vmem_limit = _vmem_params(_vmem_budget_bytes)
    NC = N * C
    x3 = x.reshape(NC, H, W)
    itemsize = jnp.dtype(x.dtype).itemsize

    per_plane = (2 * H * W + 2 * Ho * Wo) * itemsize + (H + pad_t + pad_b) * Wo * 4

    def run(seg, pt, pb):
        return _run_planes(seg, k=k, taps=taps, pad_t=pt, pad_b=pb,
                           pad_l=pad_l, pad_r=pad_r, mode=mode,
                           budget=budget, vmem_limit=vmem_limit)

    if per_plane <= budget:
        # Whole planes fit the VMEM budget: one pallas_call, zero-copy padding
        # (both axes handled in-kernel, no jnp.pad HBM round-trip).
        out3 = run(x3, pad_t, pad_b)
    else:
        # Plane too large for VMEM even at P=1 (e.g. 4K f32 frames on v7x's
        # 64 MiB): H-chunked decomposition.  Each chunk re-reads only k-1 halo
        # rows; vertical halos are materialized per chunk (tiny) while the
        # horizontal padding stays in-kernel.
        # TODO(synk): replace with a single halo-tiled pallas_call (H grid axis
        # carrying the k-1 boundary rows in scratch) to avoid the output concat.
        denom = 2 * W * itemsize + 2 * Wo * itemsize + 4 * Wo
        rows_raw = (budget - (k - 1) * (2 * W * itemsize + 4 * Wo)) // max(denom, 1)
        rows = max(8, (max(int(rows_raw), 8) // 8) * 8)
        rows = min(rows, Ho)
        chunks = []
        for r0 in range(0, Ho, rows):
            r1 = min(Ho, r0 + rows)
            lo = r0 - pad_t                       # first needed original row
            hi = r1 + (k - 1) - pad_t             # exclusive last needed row
            parts = []
            if lo < 0:
                parts.append(_halo_rows(x3, list(range(lo, 0)), mode))
            parts.append(x3[:, max(lo, 0):min(hi, H), :])
            if hi > H:
                parts.append(_halo_rows(x3, list(range(H, hi)), mode))
            seg = parts[0] if len(parts) == 1 else jnp.concatenate(parts, axis=1)
            chunks.append(run(seg, 0, 0))
        out3 = chunks[0] if len(chunks) == 1 else jnp.concatenate(chunks, axis=1)

    return out3.reshape(N, C, Ho, Wo)


def _reference(x, *, filter_size, padding, padding_mode, filter_scale=1.0):
    """Pure-JAX reference: exactly the module's math (direct kxk depthwise conv)."""
    k = filter_size
    a = np.array([_BINOMIAL_ROWS[k]], dtype=np.float64)
    filt = a * a.T
    filt = filt / filt.sum() * (float(filter_scale) ** 2)
    if padding == "same":
        pad_l, pad_r = _pad_lr(k)
        x = jnp.pad(x, ((0, 0), (0, 0), (pad_l, pad_r), (pad_l, pad_r)),
                    mode=_MODE_TO_JNP[_MODE_CANON[padding_mode]])
    Hp, Wp = x.shape[2], x.shape[3]
    Ho, Wo = Hp - k + 1, Wp - k + 1
    out = jnp.zeros(x.shape[:2] + (Ho, Wo), jnp.float32)
    for i in range(k):
        for j in range(k):
            out = out + float(filt[i, j]) * x[:, :, i:i + Ho, j:j + Wo].astype(jnp.float32)
    return out.astype(x.dtype)


if __name__ == "__main__":
    key = jax.random.PRNGKey(0)
    k1, k2, k3, k4 = jax.random.split(key, 4)

    # 1) Primary: NCHW input, k=3, 'same' reflect padding (module's typical use).
    x1 = jax.random.normal(k1, (2, 4, 16, 16), dtype=jnp.float32)
    y1 = jax.block_until_ready(low_pass_filter(
        x1, filter_size=3, padding="same", padding_mode="reflect"))
    r1 = _reference(x1, filter_size=3, padding="same", padding_mode="reflect")
    assert y1.shape == (2, 4, 16, 16)
    err1 = float(jnp.max(jnp.abs(y1 - r1)))
    assert err1 < 1e-5, f"mismatch vs reference (test 1): {err1}"

    # 2) k=5, replicate padding, non-unit filter_scale, W not a lane multiple,
    #    ragged plane grid (NC=3 with P=2 -> masked last block).
    x2 = jax.random.normal(k2, (1, 3, 20, 132), dtype=jnp.float32)
    y2 = jax.block_until_ready(low_pass_filter(
        x2, filter_size=5, padding="same", padding_mode="replicate",
        filter_scale=2.0))
    r2 = _reference(x2, filter_size=5, padding="same", padding_mode="replicate",
                    filter_scale=2.0)
    assert y2.shape == (1, 3, 20, 132)
    err2 = float(jnp.max(jnp.abs(y2 - r2)))
    assert err2 < 1e-4, f"mismatch vs reference (test 2): {err2}"

    # 3) 'valid' padding with an even filter size.
    x3 = jax.random.normal(k3, (2, 3, 17, 33), dtype=jnp.float32)
    y3 = jax.block_until_ready(low_pass_filter(
        x3, filter_size=4, padding="valid", padding_mode="reflect"))
    r3 = _reference(x3, filter_size=4, padding="valid", padding_mode="reflect")
    assert y3.shape == (2, 3, 14, 30)
    err3 = float(jnp.max(jnp.abs(y3 - r3)))
    assert err3 < 1e-5, f"mismatch vs reference (test 3): {err3}"

    # 4) Oversized-plane fallback (forced via a tiny budget): H-chunked path
    #    with circular padding so halos wrap across chunk boundaries.
    x4 = jax.random.normal(k4, (1, 2, 64, 160), dtype=jnp.float32)
    y4 = jax.block_until_ready(low_pass_filter(
        x4, filter_size=3, padding="same", padding_mode="circular",
        _vmem_budget_bytes=64 * 1024))
    r4 = _reference(x4, filter_size=3, padding="same", padding_mode="circular")
    assert y4.shape == (1, 2, 64, 160)
    err4 = float(jnp.max(jnp.abs(y4 - r4)))
    assert err4 < 1e-5, f"mismatch vs reference (test 4): {err4}"

    print("KERNEL_OK")
</pallas_src>

<mosaic_0001>
module attributes {stable_mosaic.version = 11 : i64} {
  func.func @kernel(%arg0: i32, %arg1: memref<4x16x16xf32, #tpu.memory_space<vmem>>, %arg2: memref<4x16x16xf32, #tpu.memory_space<vmem>>, %arg3: memref<4x18x16xf32, #tpu.memory_space<vmem>>) attributes {dimension_semantics = [#tpu.dimension_semantics<parallel>], iteration_bounds = array<i64: 2>, scalar_prefetch = 0 : i64, scratch_operands = 1 : i64, tpu.core_type = #tpu.core_type<tc>, window_params = [{transform_indices = @transform_0, window_bounds = array<i64: 4, 16, 16>}, {transform_indices = @transform_1, window_bounds = array<i64: 4, 16, 16>}]} {
    %c0 = arith.constant 0 : index
    %c0_0 = arith.constant 0 : index
    %c0_1 = arith.constant 0 : index
    %0 = vector.load %arg1[%c0, %c0_0, %c0_1] : memref<4x16x16xf32, #tpu.memory_space<vmem>>, vector<4x16x14xf32>
    %c0_2 = arith.constant 0 : index
    %c0_3 = arith.constant 0 : index
    %c2 = arith.constant 2 : index
    %1 = vector.load %arg1[%c0_2, %c0_3, %c2] : memref<4x16x16xf32, #tpu.memory_space<vmem>>, vector<4x16x14xf32>
    %2 = arith.addf %0, %1 : vector<4x16x14xf32>
    %cst = arith.constant 2.500000e-01 : f32
    %3 = vector.broadcast %cst : f32 to vector<4x16x14xf32>
    %4 = arith.mulf %2, %3 : vector<4x16x14xf32>
    %c0_4 = arith.constant 0 : index
    %c0_5 = arith.constant 0 : index
    %c1 = arith.constant 1 : index
    %5 = vector.load %arg1[%c0_4, %c0_5, %c1] : memref<4x16x16xf32, #tpu.memory_space<vmem>>, vector<4x16x14xf32>
    %cst_6 = arith.constant 5.000000e-01 : f32
    %6 = vector.broadcast %cst_6 : f32 to vector<4x16x14xf32>
    %7 = arith.mulf %5, %6 : vector<4x16x14xf32>
    %8 = arith.addf %4, %7 : vector<4x16x14xf32>
    %c0_7 = arith.constant 0 : index
    %c1_8 = arith.constant 1 : index
    %c1_9 = arith.constant 1 : index
    %9 = vector.load %arg3[%c0_7, %c1_8, %c1_9] : memref<4x18x16xf32, #tpu.memory_space<vmem>>, vector<4x16x14xf32>
    tpu.vector_store %arg3[%c0_7, %c1_8, %c1_9], %8 {strides = array<i32>} : memref<4x18x16xf32, #tpu.memory_space<vmem>>, vector<4x16x14xf32>,
    %c0_10 = arith.constant 0 : index
    %c0_11 = arith.constant 0 : index
    %c1_12 = arith.constant 1 : index
    %10 = vector.load %arg1[%c0_10, %c0_11, %c1_12] : memref<4x16x16xf32, #tpu.memory_space<vmem>>, vector<4x16x1xf32>
    %cst_13 = arith.constant 2.500000e-01 : f32
    %11 = vector.broadcast %cst_13 : f32 to vector<4x16x1xf32>
    %12 = arith.mulf %10, %11 : vector<4x16x1xf32>
    %c0_14 = arith.constant 0 : index
    %c0_15 = arith.constant 0 : index
    %c0_16 = arith.constant 0 : index
    %13 = vector.load %arg1[%c0_14, %c0_15, %c0_16] : memref<4x16x16xf32, #tpu.memory_space<vmem>>, vector<4x16x1xf32>
    %cst_17 = arith.constant 5.000000e-01 : f32
    %14 = vector.broadcast %cst_17 : f32 to vector<4x16x1xf32>
    %15 = arith.mulf %13, %14 : vector<4x16x1xf32>
    %16 = arith.addf %12, %15 : vector<4x16x1xf32>
    %c0_18 = arith.constant 0 : index
    %c0_19 = arith.constant 0 : index
    %c1_20 = arith.constant 1 : index
    %17 = vector.load %arg1[%c0_18, %c0_19, %c1_20] : memref<4x16x16xf32, #tpu.memory_space<vmem>>, vector<4x16x1xf32>
    %cst_21 = arith.constant 2.500000e-01 : f32
    %18 = vector.broadcast %cst_21 : f32 to vector<4x16x1xf32>
    %19 = arith.mulf %17, %18 : vector<4x16x1xf32>
    %20 = arith.addf %16, %19 : vector<4x16x1xf32>
    %c0_22 = arith.constant 0 : index
    %c1_23 = arith.constant 1 : index
    %c0_24 = arith.constant 0 : index
    %21 = vector.load %arg3[%c0_22, %c1_23, %c0_24] : memref<4x18x16xf32, #tpu.memory_space<vmem>>, vector<4x16x1xf32>
    tpu.vector_store %arg3[%c0_22, %c1_23, %c0_24], %20 {strides = array<i32>} : memref<4x18x16xf32, #tpu.memory_space<vmem>>, vector<4x16x1xf32>,
    %c0_25 = arith.constant 0 : index
    %c0_26 = arith.constant 0 : index
    %c14 = arith.constant 14 : index
    %22 = vector.load %arg1[%c0_25, %c0_26, %c14] : memref<4x16x16xf32, #tpu.memory_space<vmem>>, vector<4x16x1xf32>
    %cst_27 = arith.constant 2.500000e-01 : f32
    %23 = vector.broadcast %cst_27 : f32 to vector<4x16x1xf32>
    %24 = arith.mulf %22, %23 : vector<4x16x1xf32>
    %c0_28 = arith.constant 0 : index
    %c0_29 = arith.constant 0 : index
    %c15 = arith.constant 15 : index
    %25 = vector.load %arg1[%c0_28, %c0_29, %c15] : memref<4x16x16xf32, #tpu.memory_space<vmem>>, vector<4x16x1xf32>
    %cst_30 = arith.constant 5.000000e-01 : f32
    %26 = vector.broadcast %cst_30 : f32 to vector<4x16x1xf32>
    %27 = arith.mulf %25, %26 : vector<4x16x1xf32>
    %28 = arith.addf %24, %27 : vector<4x16x1xf32>
    %c0_31 = arith.constant 0 : index
    %c0_32 = arith.constant 0 : index
    %c14_33 = arith.constant 14 : index
    %29 = vector.load %arg1[%c0_31, %c0_32, %c14_33] : memref<4x16x16xf32, #tpu.memory_space<vmem>>, vector<4x16x1xf32>
    %cst_34 = arith.constant 2.500000e-01 : f32
    %30 = vector.broadcast %cst_34 : f32 to vector<4x16x1xf32>
    %31 = arith.mulf %29, %30 : vector<4x16x1xf32>
    %32 = arith.addf %28, %31 : vector<4x16x1xf32>
    %c0_35 = arith.constant 0 : index
    %c1_36 = arith.constant 1 : index
    %c15_37 = arith.constant 15 : index
    %33 = vector.load %arg3[%c0_35, %c1_36, %c15_37] : memref<4x18x16xf32, #tpu.memory_space<vmem>>, vector<4x16x1xf32>
    tpu.vector_store %arg3[%c0_35, %c1_36, %c15_37], %32 {strides = array<i32>} : memref<4x18x16xf32, #tpu.memory_space<vmem>>, vector<4x16x1xf32>,
    %c0_38 = arith.constant 0 : index
    %c2_39 = arith.constant 2 : index
    %c0_40 = arith.constant 0 : index
    %34 = vector.load %arg3[%c0_38, %c2_39, %c0_40] : memref<4x18x16xf32, #tpu.memory_space<vmem>>, vector<4x1x16xf32>
    %c0_41 = arith.constant 0 : index
    %c0_42 = arith.constant 0 : index
    %c0_43 = arith.constant 0 : index
    %35 = vector.load %arg3[%c0_41, %c0_42, %c0_43] : memref<4x18x16xf32, #tpu.memory_space<vmem>>, vector<4x1x16xf32>
    tpu.vector_store %arg3[%c0_41, %c0_42, %c0_43], %34 {strides = array<i32>} : memref<4x18x16xf32, #tpu.memory_space<vmem>>, vector<4x1x16xf32>,
    %c0_44 = arith.constant 0 : index
    %c15_45 = arith.constant 15 : index
    %c0_46 = arith.constant 0 : index
    %36 = vector.load %arg3[%c0_44, %c15_45, %c0_46] : memref<4x18x16xf32, #tpu.memory_space<vmem>>, vector<4x1x16xf32>
    %c0_47 = arith.constant 0 : index
    %c17 = arith.constant 17 : index
    %c0_48 = arith.constant 0 : index
    %37 = vector.load %arg3[%c0_47, %c17, %c0_48] : memref<4x18x16xf32, #tpu.memory_space<vmem>>, vector<4x1x16xf32>
    tpu.vector_store %arg3[%c0_47, %c17, %c0_48], %36 {strides = array<i32>} : memref<4x18x16xf32, #tpu.memory_space<vmem>>, vector<4x1x16xf32>,
    %c0_49 = arith.constant 0 : index
    %c0_50 = arith.constant 0 : index
    %c0_51 = arith.constant 0 : index
    %38 = vector.load %arg3[%c0_49, %c0_50, %c0_51] : memref<4x18x16xf32, #tpu.memory_space<vmem>>, vector<4x16x16xf32>
    %c0_52 = arith.constant 0 : index
    %c2_53 = arith.constant 2 : index
    %c0_54 = arith.constant 0 : index
    %39 = vector.load %arg3[%c0_52, %c2_53, %c0_54] : memref<4x18x16xf32, #tpu.memory_space<vmem>>, vector<4x16x16xf32>
    %40 = arith.addf %38, %39 : vector<4x16x16xf32>
    %cst_55 = arith.constant 2.500000e-01 : f32
    %41 = vector.broadcast %cst_55 : f32 to vector<4x16x16xf32>
    %42 = arith.mulf %40, %41 : vector<4x16x16xf32>
    %c0_56 = arith.constant 0 : index
    %c1_57 = arith.constant 1 : index
    %c0_58 = arith.constant 0 : index
    %43 = vector.load %arg3[%c0_56, %c1_57, %c0_58] : memref<4x18x16xf32, #tpu.memory_space<vmem>>, vector<4x16x16xf32>
    %cst_59 = arith.constant 5.000000e-01 : f32
    %44 = vector.broadcast %cst_59 : f32 to vector<4x16x16xf32>
    %45 = arith.mulf %43, %44 : vector<4x16x16xf32>
    %46 = arith.addf %42, %45 : vector<4x16x16xf32>
    %c0_60 = arith.constant 0 : index
    %c0_61 = arith.constant 0 : index
    %c0_62 = arith.constant 0 : index
    %47 = vector.load %arg2[%c0_60, %c0_61, %c0_62] : memref<4x16x16xf32, #tpu.memory_space<vmem>>, vector<4x16x16xf32>
    tpu.vector_store %arg2[%c0_60, %c0_61, %c0_62], %46 {strides = array<i32>} : memref<4x16x16xf32, #tpu.memory_space<vmem>>, vector<4x16x16xf32>,
    return
  }
  func.func @transform_0(%arg0: i32) -> (i32, i32, i32) {
    %c0_i32 = arith.constant 0 : i32
    %c0_i32_0 = arith.constant 0 : i32
    %c0_i32_1 = arith.constant 0 : i32
    return %arg0, %c0_i32, %c0_i32_0 : i32, i32, i32
  }
  func.func @transform_1(%arg0: i32) -> (i32, i32, i32) {
    %c0_i32 = arith.constant 0 : i32
    %c0_i32_0 = arith.constant 0 : i32
    %c0_i32_1 = arith.constant 0 : i32
    return %arg0, %c0_i32, %c0_i32_0 : i32, i32, i32
  }
}

</mosaic_0001>

<llo_original>
// kernel: tpu_custom_call.1
$region0: #{tpu_custom_call.1}
  #allocation0 [shape = 'u32[]', space=smem, size = 0x4, offset = 0x4, fixed_abs, tag = 'smem constant byte address 0x4 - core index']
  #allocation1 [shape = 'u32[144,128]{1,0:T(1,128)}', space=vmem, size = 0x12000, scoped, tag = 'internal scratch']
  #allocation2 [shape = 'f32[4,18,16]{2,1,0:T(8,128)}', space=vmem, size = 0xc000, scoped, tag = 'scratch operand']
  %s0 = inlined_call_operand.hbm [shape: f32[8,16,16], index: 0, kind: input, shape index: {}]
  %s1 = inlined_call_operand.hbm [shape: f32[8,16,16], index: 1, kind: output, shape index: {}]
  %s2 = sld [smem:[#allocation0]]
  $region41: #{tpu_custom_call.1} parent=0
    _
  %s4 = ssub.s32 1, %s2
  %s5 = scalar_select 0, %s4, %s2
  $region1: #{tpu_custom_call.1} parent=0
    #allocation3 [shape = 'u8[65536]{0}', space=vmem, size = 0x10000, scoped, tag = 'input window, operand 0']
    #allocation4 [shape = 's32[2]{0}', space=sflag, size = 0x8, scoped, tag = 'scoped memory for tpu_custom_call.1']
    #allocation5 [shape = 's32[2]{0}', space=sflag, size = 0x8, scoped, tag = 'scoped memory for tpu_custom_call.1']
    #allocation6 [shape = 'u8[65536]{0}', space=vmem, size = 0x10000, scoped, tag = 'output window, operand 0']
    %6 = vsyncpa [#allocation4], 0
    %s7 = scalar_lea.sflag [#allocation4], 1
    %8 = vsyncpa %s7, 0
    %9 = vsyncpa [#allocation5], 0
    %s10 = scalar_lea.sflag [#allocation5], 1
    %11 = vsyncpa %s10, 0
    loop: start=0, step=1, limit=4
    $region2: #{tpu_custom_call.1} parent=1 // loop_pre_header
      _
    $region3: #{tpu_custom_call.1} parent=1 // loop_header
      %s13 = sphi 0, %s17
      %p14 = scmp.ge.s32.totalorder %s13, 4
      %s23 = sphi 0, %s25
      %s26 = sphi 0, %s23
      %s27 = sphi 0, %s26
      %s43 = sphi 0, %s27
      %s49 = sphi 0, %s51
      %s52 = sphi 0, %s49
      %s53 = sphi 0, %s52
      %s69 = sphi 0, %s53
    $region4: #{tpu_custom_call.1} parent=1 // loop_header_branch
      %16 = sbr.rel (%p14) target = $region8
    $region5: #{tpu_custom_call.1} parent=1 // loop_body
      %s18 = ssub.s32 %s13, 1
      %s19 = ssub.s32 %s13, 2
      %s20 = sadd.s32 %s13, 1
      %s21 = ssub.s32 %s13, %s20
      %p22 = scmp.eq.s32.totalorder %s21, 0
      %s24 = sadd.s32 %s23, 1
      %s25 = scalar_select %p22, %s23, %s24
      %p28 = pneg %p22
      %p29 = scmp.eq.s32.totalorder %s13, 1
      %p30 = por %p28, %p29
      %p31 = scmp.ne.s32.totalorder %s23, %s26
      %p32 = scmp.eq.s32.totalorder %s13, 0
      %p33 = por %p31, %p32
      %p34 = scmp.ne.s32.totalorder %s23, %s26
      %p35 = scmp.eq.s32.totalorder %s18, 1
      %p36 = por %p34, %p35
      %p37 = scmp.ne.s32.totalorder %s26, %s27
      %p38 = scmp.eq.s32.totalorder %s18, 0
      %p39 = por %p37, %p38
      %p40 = scmp.ne.s32.totalorder %s26, %s27
      %p41 = scmp.eq.s32.totalorder %s19, 1
      %p42 = por %p40, %p41
      %p44 = scmp.ne.s32.totalorder %s27, %s43
      %p45 = scmp.eq.s32.totalorder %s19, 0
      %p46 = por %p44, %p45
      %s47 = ssub.s32 %s13, %s20
      %p48 = scmp.eq.s32.totalorder %s47, 0
      %s50 = sadd.s32 %s49, 1
      %s51 = scalar_select %p48, %s49, %s50
      %p54 = pneg %p48
      %p55 = scmp.eq.s32.totalorder %s13, 1
      %p56 = por %p54, %p55
      %p57 = scmp.ne.s32.totalorder %s49, %s52
      %p58 = scmp.eq.s32.totalorder %s13, 0
      %p59 = por %p57, %p58
      %p60 = scmp.ne.s32.totalorder %s49, %s52
      %p61 = scmp.eq.s32.totalorder %s18, 1
      %p62 = por %p60, %p61
      %p63 = scmp.ne.s32.totalorder %s52, %s53
      %p64 = scmp.eq.s32.totalorder %s18, 0
      %p65 = por %p63, %p64
      %p66 = scmp.ne.s32.totalorder %s52, %s53
      %p67 = scmp.eq.s32.totalorder %s19, 1
      %p68 = por %p66, %p67
      %p70 = scmp.ne.s32.totalorder %s53, %s69
      %p71 = scmp.eq.s32.totalorder %s19, 0
      %p72 = por %p70, %p71
      %p73 = scmp.le.s32.totalorder 1, %s13
      %p74 = scmp.lt.s32.totalorder %s13, 3
      %p75 = pnand %p73, %p74
      %p76 = pneg %p75
      // Predicated region
      $region9: #{tpu_custom_call.1} parent=5 // pred_check
        _
      $region10: #{tpu_custom_call.1} parent=5 // pred_check_branch
        %78 = sbr.rel (%p75) target = $region12
      $region11: #{tpu_custom_call.1} parent=5 // pred_region
        %s79 = ssub.s32 %s13, 1
      $region12: #{tpu_custom_call.1} parent=5 // pred_fallthru
        _
      %p80 = scmp.lt.s32.totalorder %s13, 2
      // Predicated region
      $region13: #{tpu_custom_call.1} parent=5 // pred_check
        %p81 = pneg %p80
      $region14: #{tpu_custom_call.1} parent=5 // pred_check_branch
        %83 = sbr.rel (%p81) target = $region16
      $region15: #{tpu_custom_call.1} parent=5 // pred_region
        // Predicated region
        $region17: #{tpu_custom_call.1} parent=15 // pred_check
          %p84 = pneg %p33
        $region18: #{tpu_custom_call.1} parent=15 // pred_check_branch
          %86 = sbr.rel (%p84) target = $region20
        $region19: #{tpu_custom_call.1} parent=15 // pred_region
          %s87 = sand.u32 %s23, 1
          %s88 = scalar_lea.sflag [#allocation4], %s87
          %s89 = sand.u32 %s23, 1
          %s90 = smul.addr %s89, 64
          %s91 = scalar_lea.vmem [#allocation3], %s90
          %s92 = smul.u32 4, %s13
          %s94 = ssub.s32 1024, 1024
          %95 = vsyncadd %s88, %s94
          %s96 = smul.addr %s92, 2
          %s97 = smul.addr %s96, 128
          %s98 = scalar_lea.hbm %s0, %s97
          %s99 = sshll.u32 %s91, 4
          %s100 = int_to_ptr.vmem [resolvable:$true] %s99
          %105 = dma.hbm_to_vmem [thread:$0]  %s98, 1024, %s100, %s88, 128, 128, 8
        $region20: #{tpu_custom_call.1} parent=15 // pred_fallthru
          _
      $region16: #{tpu_custom_call.1} parent=5 // pred_fallthru
        _
      %p106 = scmp.le.s32.totalorder 1, %s13
      %p107 = scmp.lt.s32.totalorder %s13, 3
      %p108 = pnand %p106, %p107
      %p109 = pneg %p108
      // Predicated region
      $region21: #{tpu_custom_call.1} parent=5 // pred_check
        _
      $region22: #{tpu_custom_call.1} parent=5 // pred_check_branch
        %111 = sbr.rel (%p108) target = $region24
      $region23: #{tpu_custom_call.1} parent=5 // pred_region
        %s112 = ssub.s32 %s13, 1
        %s113 = sand.u32 %s26, 1
        %s114 = scalar_lea.sflag [#allocation4], %s113
        %s115 = sand.u32 %s26, 1
        %s116 = smul.addr %s115, 64
        %s117 = scalar_lea.vmem [#allocation3], %s116
        // Predicated region
        $region25: #{tpu_custom_call.1} parent=23 // pred_check
          %p118 = pneg %p39
        $region26: #{tpu_custom_call.1} parent=23 // pred_check_branch
          %120 = sbr.rel (%p118) target = $region28
        $region27: #{tpu_custom_call.1} parent=23 // pred_region
          %121 = dma.done %s114, 1024
        $region28: #{tpu_custom_call.1} parent=23 // pred_fallthru
          _
        %s122 = sand.u32 %s26, 1
        %s123 = scalar_lea.sflag [#allocation4], %s122
        %s124 = sand.u32 %s26, 1
        %s125 = smul.addr %s124, 64
        %s126 = scalar_lea.vmem [#allocation3], %s125
        %p127 = pneg %p39
        %p128 = pneg %p36
        %p129 = pneg %p65
        %p130 = pneg %p62
        %s131 = sand.u32 %s52, 1
        %s132 = scalar_lea.sflag [#allocation5], %s131
        %s133 = sand.u32 %s52, 1
        %s134 = smul.addr %s133, 64
        %s135 = scalar_lea.vmem [#allocation6], %s134
        %s136 = smul.u32 4, %s18
        %s137 = smul.u32 4, %s18
        %v138 = vld [vmem:[%s117] sm:$0xff]
        %v139 = vld [vmem:[%s117 + $0x8] sm:$0xff]
        %v140 = vld [vmem:[%s117 + $0x10] sm:$0xff]
        %v141 = vld [vmem:[%s117 + $0x18] sm:$0xff]
        %v142 = vld [vmem:[%s117 + $0x20] sm:$0xff]
        %v143 = vld [vmem:[%s117 + $0x28] sm:$0xff]
        %v144 = vld [vmem:[%s117 + $0x30] sm:$0xff]
        %v145 = vld [vmem:[%s117 + $0x38] sm:$0xff]
        %154 = vrot.lane.b32.xlu0 %v138, 126
        %v155 = vpop.permute.xlu0 %154
        %156 = vrot.lane.b32.xlu0 %v139, 126
        %v157 = vpop.permute.xlu0 %156
        %158 = vrot.lane.b32.xlu0 %v140, 126
        %v159 = vpop.permute.xlu0 %158
        %160 = vrot.lane.b32.xlu0 %v141, 126
        %v161 = vpop.permute.xlu0 %160
        %162 = vrot.lane.b32.xlu0 %v142, 126
        %v163 = vpop.permute.xlu0 %162
        %164 = vrot.lane.b32.xlu0 %v143, 126
        %v165 = vpop.permute.xlu0 %164
        %166 = vrot.lane.b32.xlu0 %v144, 126
        %v167 = vpop.permute.xlu0 %166
        %168 = vrot.lane.b32.xlu0 %v145, 126
        %v169 = vpop.permute.xlu0 %168
        %v178 = vadd.f32 %v138, %v155
        %v179 = vadd.f32 %v139, %v157
        %v180 = vadd.f32 %v140, %v159
        %v181 = vadd.f32 %v141, %v161
        %v182 = vadd.f32 %v142, %v163
        %v183 = vadd.f32 %v143, %v165
        %v184 = vadd.f32 %v144, %v167
        %v185 = vadd.f32 %v145, %v169
        %v186 = vmul.f32 %v178, 0.25
        %v187 = vmul.f32 %v179, 0.25
        %v188 = vmul.f32 %v180, 0.25
        %v189 = vmul.f32 %v181, 0.25
        %v190 = vmul.f32 %v182, 0.25
        %v191 = vmul.f32 %v183, 0.25
        %v192 = vmul.f32 %v184, 0.25
        %v193 = vmul.f32 %v185, 0.25
        %v194 = vmul.f32 %v138, 0.5
        %v195 = vmul.f32 %v139, 0.5
        %v196 = vmul.f32 %v140, 0.5
        %v197 = vmul.f32 %v141, 0.5
        %v198 = vmul.f32 %v142, 0.5
        %v199 = vmul.f32 %v143, 0.5
        %v200 = vmul.f32 %v144, 0.5
        %v201 = vmul.f32 %v145, 0.5
        %210 = vrot.lane.b32.xlu0 %v194, 127
        %v211 = vpop.permute.xlu0 %210
        %212 = vrot.lane.b32.xlu0 %v195, 127
        %v213 = vpop.permute.xlu0 %212
        %214 = vrot.lane.b32.xlu0 %v196, 127
        %v215 = vpop.permute.xlu0 %214
        %216 = vrot.lane.b32.xlu0 %v197, 127
        %v217 = vpop.permute.xlu0 %216
        %218 = vrot.lane.b32.xlu0 %v198, 127
        %v219 = vpop.permute.xlu0 %218
        %220 = vrot.lane.b32.xlu0 %v199, 127
        %v221 = vpop.permute.xlu0 %220
        %222 = vrot.lane.b32.xlu0 %v200, 127
        %v223 = vpop.permute.xlu0 %222
        %224 = vrot.lane.b32.xlu0 %v201, 127
        %v225 = vpop.permute.xlu0 %224
        %v234 = vadd.f32 %v186, %v211
        %v235 = vadd.f32 %v187, %v213
        %v236 = vadd.f32 %v188, %v215
        %v237 = vadd.f32 %v189, %v217
        %v238 = vadd.f32 %v190, %v219
        %v239 = vadd.f32 %v191, %v221
        %v240 = vadd.f32 %v192, %v223
        %v241 = vadd.f32 %v193, %v225
        %250 = vrot.lane.b32.xlu0 %v234, 1
        %v251 = vpop.permute.xlu0 %250
        %252 = vrot.lane.b32.xlu0 %v235, 1
        %v253 = vpop.permute.xlu0 %252
        %254 = vrot.lane.b32.xlu0 %v236, 1
        %v255 = vpop.permute.xlu0 %254
        %256 = vrot.lane.b32.xlu0 %v237, 1
        %v257 = vpop.permute.xlu0 %256
        %258 = vrot.lane.b32.xlu0 %v238, 1
        %v259 = vpop.permute.xlu0 %258
        %260 = vrot.lane.b32.xlu0 %v239, 1
        %v261 = vpop.permute.xlu0 %260
        %262 = vrot.lane.b32.xlu0 %v240, 1
        %v263 = vpop.permute.xlu0 %262
        %264 = vrot.lane.b32.xlu0 %v241, 1
        %v265 = vpop.permute.xlu0 %264
        %vm274 = vcmask 121864
        %275 = vst.msk [vmem:[#allocation2 + $0x1] sm:$0xff] %vm274, %v251
        %276 = vst.msk [vmem:[#allocation2 + $0x9] sm:$0xff] %vm274, %v253
        %277 = vst.msk [vmem:[#allocation2 + $0x19] sm:$0xff] %vm274, %v255
        %278 = vst.msk [vmem:[#allocation2 + $0x21] sm:$0xff] %vm274, %v257
        %279 = vst.msk [vmem:[#allocation2 + $0x31] sm:$0xff] %vm274, %v259
        %280 = vst.msk [vmem:[#allocation2 + $0x39] sm:$0xff] %vm274, %v261
        %281 = vst.msk [vmem:[#allocation2 + $0x49] sm:$0xff] %vm274, %v263
        %282 = vst.msk [vmem:[#allocation2 + $0x51] sm:$0xff] %vm274, %v265
        %v283 = vld [vmem:[%s117] sm:$0xff]
        %v284 = vld [vmem:[%s117 + $0x8] sm:$0xff]
        %v285 = vld [vmem:[%s117 + $0x10] sm:$0xff]
        %v286 = vld [vmem:[%s117 + $0x18] sm:$0xff]
        %v287 = vld [vmem:[%s117 + $0x20] sm:$0xff]
        %v288 = vld [vmem:[%s117 + $0x28] sm:$0xff]
        %v289 = vld [vmem:[%s117 + $0x30] sm:$0xff]
        %v290 = vld [vmem:[%s117 + $0x38] sm:$0xff]
        %v291 = vmul.f32 %v283, 0.25
        %v292 = vmul.f32 %v284, 0.25
        %v293 = vmul.f32 %v285, 0.25
        %v294 = vmul.f32 %v286, 0.25
        %v295 = vmul.f32 %v287, 0.25
        %v296 = vmul.f32 %v288, 0.25
        %v297 = vmul.f32 %v289, 0.25
        %v298 = vmul.f32 %v290, 0.25
        %v299 = vmul.f32 %v283, 0.5
        %v300 = vmul.f32 %v284, 0.5
        %v301 = vmul.f32 %v285, 0.5
        %v302 = vmul.f32 %v286, 0.5
        %v303 = vmul.f32 %v287, 0.5
        %v304 = vmul.f32 %v288, 0.5
        %v305 = vmul.f32 %v289, 0.5
        %v306 = vmul.f32 %v290, 0.5
        %315 = vrot.lane.b32.xlu0 %v299, 1
        %v316 = vpop.permute.xlu0 %315
        %317 = vrot.lane.b32.xlu0 %v300, 1
        %v318 = vpop.permute.xlu0 %317
        %319 = vrot.lane.b32.xlu0 %v301, 1
        %v320 = vpop.permute.xlu0 %319
        %321 = vrot.lane.b32.xlu0 %v302, 1
        %v322 = vpop.permute.xlu0 %321
        %323 = vrot.lane.b32.xlu0 %v303, 1
        %v324 = vpop.permute.xlu0 %323
        %325 = vrot.lane.b32.xlu0 %v304, 1
        %v326 = vpop.permute.xlu0 %325
        %327 = vrot.lane.b32.xlu0 %v305, 1
        %v328 = vpop.permute.xlu0 %327
        %329 = vrot.lane.b32.xlu0 %v306, 1
        %v330 = vpop.permute.xlu0 %329
        %v339 = vadd.f32 %v291, %v316
        %v340 = vadd.f32 %v292, %v318
        %v341 = vadd.f32 %v293, %v320
        %v342 = vadd.f32 %v294, %v322
        %v343 = vadd.f32 %v295, %v324
        %v344 = vadd.f32 %v296, %v326
        %v345 = vadd.f32 %v297, %v328
        %v346 = vadd.f32 %v298, %v330
        %v347 = vadd.f32 %v339, %v291
        %v348 = vadd.f32 %v340, %v292
        %v349 = vadd.f32 %v341, %v293
        %v350 = vadd.f32 %v342, %v294
        %v351 = vadd.f32 %v343, %v295
        %v352 = vadd.f32 %v344, %v296
        %v353 = vadd.f32 %v345, %v297
        %v354 = vadd.f32 %v346, %v298
        %363 = vrot.lane.b32.xlu0 %v347, 127
        %v364 = vpop.permute.xlu0 %363
        %365 = vrot.lane.b32.xlu0 %v348, 127
        %v366 = vpop.permute.xlu0 %365
        %367 = vrot.lane.b32.xlu0 %v349, 127
        %v368 = vpop.permute.xlu0 %367
        %369 = vrot.lane.b32.xlu0 %v350, 127
        %v370 = vpop.permute.xlu0 %369
        %371 = vrot.lane.b32.xlu0 %v351, 127
        %v372 = vpop.permute.xlu0 %371
        %373 = vrot.lane.b32.xlu0 %v352, 127
        %v374 = vpop.permute.xlu0 %373
        %375 = vrot.lane.b32.xlu0 %v353, 127
        %v376 = vpop.permute.xlu0 %375
        %377 = vrot.lane.b32.xlu0 %v354, 127
        %v378 = vpop.permute.xlu0 %377
        %vm387 = vcmask 7168
        %388 = vst.msk [vmem:[#allocation2 + $0x1] sm:$0xff] %vm387, %v364
        %389 = vst.msk [vmem:[#allocation2 + $0x9] sm:$0xff] %vm387, %v366
        %390 = vst.msk [vmem:[#allocation2 + $0x19] sm:$0xff] %vm387, %v368
        %391 = vst.msk [vmem:[#allocation2 + $0x21] sm:$0xff] %vm387, %v370
        %392 = vst.msk [vmem:[#allocation2 + $0x31] sm:$0xff] %vm387, %v372
        %393 = vst.msk [vmem:[#allocation2 + $0x39] sm:$0xff] %vm387, %v374
        %394 = vst.msk [vmem:[#allocation2 + $0x49] sm:$0xff] %vm387, %v376
        %395 = vst.msk [vmem:[#allocation2 + $0x51] sm:$0xff] %vm387, %v378
        %v396 = vld [vmem:[%s117] sm:$0xff]
        %v397 = vld [vmem:[%s117 + $0x8] sm:$0xff]
        %v398 = vld [vmem:[%s117 + $0x10] sm:$0xff]
        %v399 = vld [vmem:[%s117 + $0x18] sm:$0xff]
        %v400 = vld [vmem:[%s117 + $0x20] sm:$0xff]
        %v401 = vld [vmem:[%s117 + $0x28] sm:$0xff]
        %v402 = vld [vmem:[%s117 + $0x30] sm:$0xff]
        %v403 = vld [vmem:[%s117 + $0x38] sm:$0xff]
        %v404 = vmul.f32 %v396, 0.25
        %v405 = vmul.f32 %v397, 0.25
        %v406 = vmul.f32 %v398, 0.25
        %v407 = vmul.f32 %v399, 0.25
        %v408 = vmul.f32 %v400, 0.25
        %v409 = vmul.f32 %v401, 0.25
        %v410 = vmul.f32 %v402, 0.25
        %v411 = vmul.f32 %v403, 0.25
        %v412 = vmul.f32 %v396, 0.5
        %v413 = vmul.f32 %v397, 0.5
        %v414 = vmul.f32 %v398, 0.5
        %v415 = vmul.f32 %v399, 0.5
        %v416 = vmul.f32 %v400, 0.5
        %v417 = vmul.f32 %v401, 0.5
        %v418 = vmul.f32 %v402, 0.5
        %v419 = vmul.f32 %v403, 0.5
        %428 = vrot.lane.b32.xlu0 %v412, 127
        %v429 = vpop.permute.xlu0 %428
        %430 = vrot.lane.b32.xlu0 %v413, 127
        %v431 = vpop.permute.xlu0 %430
        %432 = vrot.lane.b32.xlu0 %v414, 127
        %v433 = vpop.permute.xlu0 %432
        %434 = vrot.lane.b32.xlu0 %v415, 127
        %v435 = vpop.permute.xlu0 %434
        %436 = vrot.lane.b32.xlu0 %v416, 127
        %v437 = vpop.permute.xlu0 %436
        %438 = vrot.lane.b32.xlu0 %v417, 127
        %v439 = vpop.permute.xlu0 %438
        %440 = vrot.lane.b32.xlu0 %v418, 127
        %v441 = vpop.permute.xlu0 %440
        %442 = vrot.lane.b32.xlu0 %v419, 127
        %v443 = vpop.permute.xlu0 %442
        %v452 = vadd.f32 %v404, %v429
        %v453 = vadd.f32 %v405, %v431
        %v454 = vadd.f32 %v406, %v433
        %v455 = vadd.f32 %v407, %v435
        %v456 = vadd.f32 %v408, %v437
        %v457 = vadd.f32 %v409, %v439
        %v458 = vadd.f32 %v410, %v441
        %v459 = vadd.f32 %v411, %v443
        %v460 = vadd.f32 %v452, %v404
        %v461 = vadd.f32 %v453, %v405
        %v462 = vadd.f32 %v454, %v406
        %v463 = vadd.f32 %v455, %v407
        %v464 = vadd.f32 %v456, %v408
        %v465 = vadd.f32 %v457, %v409
        %v466 = vadd.f32 %v458, %v410
        %v467 = vadd.f32 %v459, %v411
        %476 = vrot.lane.b32.xlu0 %v460, 1
        %v477 = vpop.permute.xlu0 %476
        %478 = vrot.lane.b32.xlu0 %v461, 1
        %v479 = vpop.permute.xlu0 %478
        %480 = vrot.lane.b32.xlu0 %v462, 1
        %v481 = vpop.permute.xlu0 %480
        %482 = vrot.lane.b32.xlu0 %v463, 1
        %v483 = vpop.permute.xlu0 %482
        %484 = vrot.lane.b32.xlu0 %v464, 1
        %v485 = vpop.permute.xlu0 %484
        %486 = vrot.lane.b32.xlu0 %v465, 1
        %v487 = vpop.permute.xlu0 %486
        %488 = vrot.lane.b32.xlu0 %v466, 1
        %v489 = vpop.permute.xlu0 %488
        %490 = vrot.lane.b32.xlu0 %v467, 1
        %v491 = vpop.permute.xlu0 %490
        %vm500 = vcmask 130168
        %501 = vst.msk [vmem:[#allocation2 + $0x1] sm:$0xff] %vm500, %v477
        %502 = vst.msk [vmem:[#allocation2 + $0x9] sm:$0xff] %vm500, %v479
        %503 = vst.msk [vmem:[#allocation2 + $0x19] sm:$0xff] %vm500, %v481
        %504 = vst.msk [vmem:[#allocation2 + $0x21] sm:$0xff] %vm500, %v483
        %505 = vst.msk [vmem:[#allocation2 + $0x31] sm:$0xff] %vm500, %v485
        %506 = vst.msk [vmem:[#allocation2 + $0x39] sm:$0xff] %vm500, %v487
        %507 = vst.msk [vmem:[#allocation2 + $0x49] sm:$0xff] %vm500, %v489
        %508 = vst.msk [vmem:[#allocation2 + $0x51] sm:$0xff] %vm500, %v491
        %v509 = vld [vmem:[#allocation2 + $0x2] sm:$0x1]
        %v510 = vld [vmem:[#allocation2 + $0x1a] sm:$0x1]
        %v511 = vld [vmem:[#allocation2 + $0x32] sm:$0x1]
        %v512 = vld [vmem:[#allocation2 + $0x4a] sm:$0x1]
        %vm513 = vcmask 122880
        %514 = vst.msk [vmem:[#allocation2] sm:$0x1] %vm513, %v509
        %515 = vst.msk [vmem:[#allocation2 + $0x18] sm:$0x1] %vm513, %v510
        %516 = vst.msk [vmem:[#allocation2 + $0x30] sm:$0x1] %vm513, %v511
        %517 = vst.msk [vmem:[#allocation2 + $0x48] sm:$0x1] %vm513, %v512
        %v518 = vld [vmem:[#allocation2 + $0xf] sm:$0x1]
        %v519 = vld [vmem:[#allocation2 + $0x27] sm:$0x1]
        %v520 = vld [vmem:[#allocation2 + $0x3f] sm:$0x1]
        %v521 = vld [vmem:[#allocation2 + $0x57] sm:$0x1]
        %522 = vst.msk [vmem:[#allocation2 + $0x11] sm:$0x1] %vm513, %v518
        %523 = vst.msk [vmem:[#allocation2 + $0x29] sm:$0x1] %vm513, %v519
        %524 = vst.msk [vmem:[#allocation2 + $0x41] sm:$0x1] %vm513, %v520
        %525 = vst.msk [vmem:[#allocation2 + $0x59] sm:$0x1] %vm513, %v521
        %v526 = vld [vmem:[#allocation2] sm:$0xff]
        %v527 = vld [vmem:[#allocation2 + $0x8] sm:$0xff]
        %v528 = vld [vmem:[#allocation2 + $0x18] sm:$0xff]
        %v529 = vld [vmem:[#allocation2 + $0x20] sm:$0xff]
        %v530 = vld [vmem:[#allocation2 + $0x30] sm:$0xff]
        %v531 = vld [vmem:[#allocation2 + $0x38] sm:$0xff]
        %v532 = vld [vmem:[#allocation2 + $0x48] sm:$0xff]
        %v533 = vld [vmem:[#allocation2 + $0x50] sm:$0xff]
        %v534 = vld [vmem:[#allocation2 + $0x2] sm:$0xff]
        %v535 = vld [vmem:[#allocation2 + $0xa] sm:$0xff]
        %v536 = vld [vmem:[#allocation2 + $0x1a] sm:$0xff]
        %v537 = vld [vmem:[#allocation2 + $0x22] sm:$0xff]
        %v538 = vld [vmem:[#allocation2 + $0x32] sm:$0xff]
        %v539 = vld [vmem:[#allocation2 + $0x3a] sm:$0xff]
        %v540 = vld [vmem:[#allocation2 + $0x4a] sm:$0xff]
        %v541 = vld [vmem:[#allocation2 + $0x52] sm:$0xff]
        %v542 = vadd.f32 %v526, %v534
        %v543 = vadd.f32 %v527, %v535
        %v544 = vadd.f32 %v528, %v536
        %v545 = vadd.f32 %v529, %v537
        %v546 = vadd.f32 %v530, %v538
        %v547 = vadd.f32 %v531, %v539
        %v548 = vadd.f32 %v532, %v540
        %v549 = vadd.f32 %v533, %v541
        %v550 = vmul.f32 %v542, 0.25
        %v551 = vmul.f32 %v543, 0.25
        %v552 = vmul.f32 %v544, 0.25
        %v553 = vmul.f32 %v545, 0.25
        %v554 = vmul.f32 %v546, 0.25
        %v555 = vmul.f32 %v547, 0.25
        %v556 = vmul.f32 %v548, 0.25
        %v557 = vmul.f32 %v549, 0.25
        %v558 = vld [vmem:[#allocation2 + $0x1] sm:$0xff]
        %v559 = vld [vmem:[#allocation2 + $0x9] sm:$0xff]
        %v560 = vld [vmem:[#allocation2 + $0x19] sm:$0xff]
        %v561 = vld [vmem:[#allocation2 + $0x21] sm:$0xff]
        %v562 = vld [vmem:[#allocation2 + $0x31] sm:$0xff]
        %v563 = vld [vmem:[#allocation2 + $0x39] sm:$0xff]
        %v564 = vld [vmem:[#allocation2 + $0x49] sm:$0xff]
        %v565 = vld [vmem:[#allocation2 + $0x51] sm:$0xff]
        %v566 = vmul.f32 %v558, 0.5
        %v567 = vmul.f32 %v559, 0.5
        %v568 = vmul.f32 %v560, 0.5
        %v569 = vmul.f32 %v561, 0.5
        %v570 = vmul.f32 %v562, 0.5
        %v571 = vmul.f32 %v563, 0.5
        %v572 = vmul.f32 %v564, 0.5
        %v573 = vmul.f32 %v565, 0.5
        %v574 = vadd.f32 %v550, %v566
        %v575 = vadd.f32 %v551, %v567
        %v576 = vadd.f32 %v552, %v568
        %v577 = vadd.f32 %v553, %v569
        %v578 = vadd.f32 %v554, %v570
        %v579 = vadd.f32 %v555, %v571
        %v580 = vadd.f32 %v556, %v572
        %v581 = vadd.f32 %v557, %v573
        %vm582 = vcmask 130048
        %583 = vst.msk [vmem:[%s135] sm:$0xff] %vm582, %v574
        %584 = vst.msk [vmem:[%s135 + $0x8] sm:$0xff] %vm582, %v575
        %585 = vst.msk [vmem:[%s135 + $0x10] sm:$0xff] %vm582, %v576
        %586 = vst.msk [vmem:[%s135 + $0x18] sm:$0xff] %vm582, %v577
        %587 = vst.msk [vmem:[%s135 + $0x20] sm:$0xff] %vm582, %v578
        %588 = vst.msk [vmem:[%s135 + $0x28] sm:$0xff] %vm582, %v579
        %589 = vst.msk [vmem:[%s135 + $0x30] sm:$0xff] %vm582, %v580
        %590 = vst.msk [vmem:[%s135 + $0x38] sm:$0xff] %vm582, %v581
        %s591 = sand.u32 %s52, 1
        %s592 = scalar_lea.sflag [#allocation5], %s591
        %s593 = sand.u32 %s52, 1
        %s594 = smul.addr %s593, 64
        %s595 = scalar_lea.vmem [#allocation6], %s594
        // Predicated region
        $region29: #{tpu_custom_call.1} parent=23 // pred_check
          %p596 = pneg %p62
        $region30: #{tpu_custom_call.1} parent=23 // pred_check_branch
          %598 = sbr.rel (%p596) target = $region32
        $region31: #{tpu_custom_call.1} parent=23 // pred_region
          %s599 = smul.u32 4, %s18
          %s601 = ssub.s32 1024, 1024
          %602 = vsyncadd %s592, %s601
          %s603 = smul.addr %s599, 2
          %s604 = smul.addr %s603, 128
          %s605 = scalar_lea.hbm %s1, %s604
          %s606 = sshll.u32 %s595, 4
          %s607 = int_to_ptr.vmem [resolvable:$true] %s606
          %612 = dma.vmem_to_hbm [thread:$0]  %s607, 1024, %s605, %s592, 128, 128, 8
        $region32: #{tpu_custom_call.1} parent=23 // pred_fallthru
          _
      $region24: #{tpu_custom_call.1} parent=5 // pred_fallthru
        _
      %p613 = scmp.le.s32.totalorder 2, %s13
      // Predicated region
      $region33: #{tpu_custom_call.1} parent=5 // pred_check
        %p614 = pneg %p613
      $region34: #{tpu_custom_call.1} parent=5 // pred_check_branch
        %616 = sbr.rel (%p614) target = $region36
      $region35: #{tpu_custom_call.1} parent=5 // pred_region
        %s617 = ssub.s32 %s13, 2
        // Predicated region
        $region37: #{tpu_custom_call.1} parent=35 // pred_check
          %p618 = pneg %p68
        $region38: #{tpu_custom_call.1} parent=35 // pred_check_branch
          %620 = sbr.rel (%p618) target = $region40
        $region39: #{tpu_custom_call.1} parent=35 // pred_region
          %s621 = sand.u32 %s53, 1
          %s622 = scalar_lea.sflag [#allocation5], %s621
          %s623 = sand.u32 %s53, 1
          %s624 = smul.addr %s623, 64
          %s625 = scalar_lea.vmem [#allocation6], %s624
          %626 = dma.done %s622, 1024
        $region40: #{tpu_custom_call.1} parent=35 // pred_fallthru
          _
      $region36: #{tpu_custom_call.1} parent=5 // pred_fallthru
        _
    $region6: #{tpu_custom_call.1} parent=1 // loop_footer
      %s17 = sadd.s32 1, %s13
    $region7: #{tpu_custom_call.1} parent=1 // loop_footer_branch
      %12 = sbr.rel target = $region3
    $region8: #{tpu_custom_call.1} parent=1 // loop_exit
      _
    %627 = vsyncpa [#allocation4], 1
    %s628 = scalar_lea.sflag [#allocation4], 1
    %629 = vsyncpa %s628, 1
    %630 = vsyncpa [#allocation5], 1
    %s631 = scalar_lea.sflag [#allocation5], 1
    %632 = vsyncpa %s631, 1

</llo_original>
